<compile_context>
chip_gen: v5e
topology: v5e:2x2
jax: 0.10.0
libtpu: 0.0.40
codegen_flags: <defaults>
</compile_context>

<pallas_src>
import functools

import jax
import jax.numpy as jnp
from jax import lax
from jax.experimental import pallas as pl
from jax.experimental.pallas import tpu as pltpu

LANES = 128
SUBLANES = 8
NUM_ACCS = 4                      # bce, intersection, sum(sigmoid), sum(targets)
ACC_ROWS = NUM_ACCS * SUBLANES    # packed accumulator slab height
MAX_BLOCK_ROWS = 4096             # 4096*128*4B = 2 MiB per f32 input tile
NCORES = 2                        # megacore split on v7x; size-1/2 loop elsewhere
VMEM_LIMIT_BYTES = 48 * 1024 * 1024


def _make_kernel(n, block_rows, steps_per_core):
    block_elems = block_rows * LANES

    def kernel(x_ref, t_ref, acc_ref):
        @pl.when(pl.program_id(1) == 0)
        def _():
            acc_ref[...] = jnp.zeros_like(acc_ref)

        # Logical (unclamped) flat-element offset covered by this grid step.
        # The input index_map clamps the block index so the DMA window stays in
        # bounds; overhang steps are fully masked out below.
        block_idx = pl.program_id(0) * steps_per_core + pl.program_id(1)
        base = block_idx * block_elems

        x = x_ref[...].astype(jnp.float32)
        t = t_ref[...].astype(jnp.float32)

        # Shared transcendentals for BCE-with-logits and sigmoid:
        #   e = exp(-|x|); log1p(exp(-|x|)) ~= log(1+e);
        #   sigmoid(x) = 1/(1+e) (x>=0) or e/(1+e) (x<0)
        e = jnp.exp(-jnp.abs(x))
        denom = 1.0 + e
        inv = 1.0 / denom
        p = jnp.where(x >= 0.0, inv, e * inv)
        # Stable BCE-with-logits elementwise term: max(x,0) - x*t + log(1+e^-|x|)
        bce = jnp.maximum(x, 0.0) - x * t + jnp.log(denom)
        is_one = t == 1.0

        def fold(v):
            # (block_rows,128) -> (g,8,128) summed over g: pure vreg adds; the
            # accumulator stays a full (8,128) tile (unmasked stores).
            return jnp.sum(v.reshape(-1, SUBLANES, LANES), axis=0)

        def accumulate(bce_v, inter_v, p_v, tb_v):
            for k, v in enumerate((bce_v, inter_v, p_v, tb_v)):
                r = k * SUBLANES
                acc_ref[r:r + SUBLANES, :] += fold(v)

        is_full = base + block_elems <= n

        @pl.when(is_full)
        def _():
            accumulate(bce, jnp.where(is_one, p, 0.0), p,
                       is_one.astype(jnp.float32))

        @pl.when(jnp.logical_not(is_full))
        def _():
            # Block crosses (or lies past) the end of the data: mask by flat
            # element index.  Out-of-range lanes may hold stale VMEM garbage or
            # the explicit <128-element pad; where() drops them (incl. NaN/Inf).
            idx = base + (
                lax.broadcasted_iota(jnp.int32, (block_rows, LANES), 0) * LANES
                + lax.broadcasted_iota(jnp.int32, (block_rows, LANES), 1))
            valid = idx < n
            p_m = jnp.where(valid, p, 0.0)
            bce_m = jnp.where(valid, bce, 0.0)
            tb_m = jnp.where(jnp.logical_and(valid, is_one), 1.0, 0.0)
            accumulate(bce_m, jnp.where(is_one, p_m, 0.0), p_m, tb_m)

    return kernel


@functools.partial(jax.jit, static_argnames=("jaccard_weight", "smooth"))
def bce_jaccard_with_logits_loss(outputs, targets, jaccard_weight=1, smooth=1):
    if outputs.shape != targets.shape:
        raise ValueError(
            "size mismatch, {} != {}".format(outputs.shape, targets.shape))

    n = outputs.size

    # --- static tiling arithmetic (all Python ints) ---------------------------
    rows = pl.cdiv(n, LANES)
    rows_arr = max(rows, 2 * SUBLANES)            # >=16 rows (f32/bf16 tile rule)
    block_rows = min(MAX_BLOCK_ROWS, (rows_arr // 16) * 16)   # 16-mult, <= rows_arr
    steps_total = pl.cdiv(rows_arr, block_rows)
    ncores = NCORES if steps_total >= NCORES else 1
    steps_per_core = pl.cdiv(steps_total, ncores)
    last_block = steps_total - 1

    n_arr = rows_arr * LANES
    pad = n_arr - n                                # 0 whenever n is 128-aligned

    def _prep(a):
        flat = jnp.ravel(a)                        # metadata-only for contiguous
        if pad:                                    # only the unaligned tail case
            flat = jnp.pad(flat, (0, pad))
        return flat.reshape(rows_arr, LANES)

    x2 = _prep(outputs)
    t2 = _prep(targets)

    def in_index_map(c, i):
        # Clamp so the DMA window of overhang steps stays in bounds; their
        # contribution is masked to zero inside the kernel.
        return (jnp.minimum(c * steps_per_core + i, last_block), 0)

    in_spec = pl.BlockSpec((block_rows, LANES), in_index_map)
    out_spec = pl.BlockSpec((None, ACC_ROWS, LANES), lambda c, i: (c, 0, 0))

    bytes_accessed = int(x2.size * x2.dtype.itemsize
                         + t2.size * t2.dtype.itemsize
                         + ncores * ACC_ROWS * LANES * 4)
    cost = pl.CostEstimate(flops=20 * n_arr, transcendentals=2 * n_arr,
                           bytes_accessed=bytes_accessed)

    acc = pl.pallas_call(
        _make_kernel(n, block_rows, steps_per_core),
        out_shape=jax.ShapeDtypeStruct((ncores, ACC_ROWS, LANES), jnp.float32),
        grid_spec=pltpu.PrefetchScalarGridSpec(
            num_scalar_prefetch=0,
            grid=(ncores, steps_per_core),
            in_specs=[in_spec, in_spec],
            out_specs=out_spec,
        ),
        compiler_params=pltpu.CompilerParams(
            dimension_semantics=("parallel", "arbitrary"),
            vmem_limit_bytes=VMEM_LIMIT_BYTES),
        cost_estimate=cost,
    )(x2, t2)

    # --- scalar glue: fold partials and combine -------------------------------
    acc = jnp.sum(acc, axis=0)                     # (32, 128) f32
    bce_sum = jnp.sum(acc[0 * SUBLANES:1 * SUBLANES])
    intersection = jnp.sum(acc[1 * SUBLANES:2 * SUBLANES])
    probs_sum = jnp.sum(acc[2 * SUBLANES:3 * SUBLANES])
    targets_sum = jnp.sum(acc[3 * SUBLANES:4 * SUBLANES])

    loss = bce_sum / jnp.float32(n)                # BCEWithLogitsLoss 'mean'
    if jaccard_weight:
        union = probs_sum + targets_sum - intersection
        loss = loss - jaccard_weight * jnp.log(
            (intersection + smooth) / (union + smooth))
    return loss


def _reference_loss(outputs, targets, jaccard_weight=1, smooth=1):
    x = outputs.astype(jnp.float32)
    t = targets.astype(jnp.float32)
    bce = jnp.mean(jnp.maximum(x, 0.0) - x * t + jnp.log1p(jnp.exp(-jnp.abs(x))))
    tb = (t == 1.0).astype(jnp.float32).ravel()
    p = jax.nn.sigmoid(x).ravel()
    inter = jnp.sum(tb * p)
    union = jnp.sum(p) + jnp.sum(tb) - inter
    return bce - jaccard_weight * jnp.log((inter + smooth) / (union + smooth))


if __name__ == "__main__":
    key = jax.random.PRNGKey(0)
    k1, k2 = jax.random.split(key)

    # Primary check: NCHW segmentation logits / binary masks (128-aligned,
    # zero-copy full-block path).
    outputs = jax.random.normal(k1, (2, 4, 16, 16), dtype=jnp.float32)
    targets = (jax.random.uniform(k2, (2, 4, 16, 16)) > 0.5).astype(jnp.float32)
    loss = jax.block_until_ready(
        bce_jaccard_with_logits_loss(outputs, targets, jaccard_weight=1, smooth=1))
    ref = _reference_loss(outputs, targets, jaccard_weight=1, smooth=1)
    assert jnp.allclose(loss, ref, rtol=1e-5, atol=1e-5), (loss, ref)

    # Secondary check: rows not a multiple of the block -> partial last block +
    # two-core grid + in-kernel masking (still zero-copy, n % 128 == 0).
    k3, k4 = jax.random.split(k1)
    out2 = jax.random.normal(k3, (2, 4, 18, 16), dtype=jnp.float32)
    tgt2 = (jax.random.uniform(k4, (2, 4, 18, 16)) > 0.5).astype(jnp.float32)
    loss2 = jax.block_until_ready(
        bce_jaccard_with_logits_loss(out2, tgt2, jaccard_weight=1, smooth=1))
    ref2 = _reference_loss(out2, tgt2, jaccard_weight=1, smooth=1)
    assert jnp.allclose(loss2, ref2, rtol=1e-5, atol=1e-5), (loss2, ref2)

    # Tertiary check: numel not 128-aligned (tiny pad + element-level masking).
    k5, k6 = jax.random.split(k2)
    out3 = jax.random.normal(k5, (1, 3, 11, 13), dtype=jnp.float32)
    tgt3 = (jax.random.uniform(k6, (1, 3, 11, 13)) > 0.5).astype(jnp.float32)
    loss3 = jax.block_until_ready(
        bce_jaccard_with_logits_loss(out3, tgt3, jaccard_weight=1, smooth=1))
    ref3 = _reference_loss(out3, tgt3, jaccard_weight=1, smooth=1)
    assert jnp.allclose(loss3, ref3, rtol=1e-5, atol=1e-5), (loss3, ref3)

    print("KERNEL_OK")
</pallas_src>

<mosaic_0001>
module attributes {stable_mosaic.version = 11 : i64} {
  func.func @kernel(%arg0: i32, %arg1: i32, %arg2: memref<16x128xf32, #tpu.memory_space<vmem>>, %arg3: memref<16x128xf32, #tpu.memory_space<vmem>>, %arg4: memref<1x32x128xf32, #tpu.memory_space<vmem>>) attributes {dimension_semantics = [#tpu.dimension_semantics<parallel>, #tpu.dimension_semantics<arbitrary>], iteration_bounds = array<i64: 1, 1>, scalar_prefetch = 0 : i64, scratch_operands = 0 : i64, tpu.core_type = #tpu.core_type<tc>, window_params = [{transform_indices = @transform_0, window_bounds = array<i64: 16, 128>}, {transform_indices = @transform_1, window_bounds = array<i64: 16, 128>}, {transform_indices = @transform_2, window_bounds = array<i64: 1, 32, 128>}]} {
    %c0_i32 = arith.constant 0 : i32
    %0 = arith.cmpi eq, %arg1, %c0_i32 : i32
    %1 = arith.extui %0 : i1 to i32
    %c0_i32_0 = arith.constant 0 : i32
    %2 = arith.cmpi ne, %1, %c0_i32_0 : i32
    scf.if %2 {
      %cst_13 = arith.constant 0.000000e+00 : f32
      %35 = vector.broadcast %cst_13 : f32 to vector<32x128xf32>
      %c0_14 = arith.constant 0 : index
      %c0_15 = arith.constant 0 : index
      %c0_16 = arith.constant 0 : index
      %36 = vector.load %arg4[%c0_14, %c0_15, %c0_16] : memref<1x32x128xf32, #tpu.memory_space<vmem>>, vector<1x32x128xf32>
      %37 = vector.shape_cast %36 : vector<1x32x128xf32> to vector<32x128xf32>
      %38 = vector.shape_cast %35 : vector<32x128xf32> to vector<1x32x128xf32>
      tpu.vector_store %arg4[%c0_14, %c0_15, %c0_16], %38 {strides = array<i32>} : memref<1x32x128xf32, #tpu.memory_space<vmem>>, vector<1x32x128xf32>,
    } else {
    }
    %c1_i32 = arith.constant 1 : i32
    %3 = arith.muli %arg0, %c1_i32 : i32
    %4 = arith.addi %3, %arg1 : i32
    %c2048_i32 = arith.constant 2048 : i32
    %5 = arith.muli %4, %c2048_i32 : i32
    %c0 = arith.constant 0 : index
    %c0_1 = arith.constant 0 : index
    %6 = vector.load %arg2[%c0, %c0_1] : memref<16x128xf32, #tpu.memory_space<vmem>>, vector<16x128xf32>
    %c0_2 = arith.constant 0 : index
    %c0_3 = arith.constant 0 : index
    %7 = vector.load %arg3[%c0_2, %c0_3] : memref<16x128xf32, #tpu.memory_space<vmem>>, vector<16x128xf32>
    %8 = math.absf %6 : vector<16x128xf32>
    %cst = arith.constant 0.000000e+00 : f32
    %9 = vector.broadcast %cst : f32 to vector<16x128xf32>
    %10 = arith.subf %9, %8 : vector<16x128xf32>
    %11 = math.exp %10 : vector<16x128xf32>
    %cst_4 = arith.constant 1.000000e+00 : f32
    %12 = vector.broadcast %cst_4 : f32 to vector<16x128xf32>
    %13 = arith.addf %12, %11 : vector<16x128xf32>
    %cst_5 = arith.constant 1.000000e+00 : f32
    %14 = vector.broadcast %cst_5 : f32 to vector<16x128xf32>
    %15 = arith.divf %14, %13 : vector<16x128xf32>
    %cst_6 = arith.constant 0.000000e+00 : f32
    %16 = vector.broadcast %cst_6 : f32 to vector<16x128xf32>
    %17 = arith.cmpf oge, %6, %16 : vector<16x128xf32>
    %18 = arith.mulf %11, %15 : vector<16x128xf32>
    %19 = arith.select %17, %15, %18 : vector<16x128xi1>, vector<16x128xf32>
    %cst_7 = arith.constant 0.000000e+00 : f32
    %20 = vector.broadcast %cst_7 : f32 to vector<16x128xf32>
    %21 = arith.maximumf %6, %20 : vector<16x128xf32>
    %22 = arith.mulf %6, %7 : vector<16x128xf32>
    %23 = arith.subf %21, %22 : vector<16x128xf32>
    %24 = math.log %13 : vector<16x128xf32>
    %25 = arith.addf %23, %24 : vector<16x128xf32>
    %cst_8 = arith.constant 1.000000e+00 : f32
    %26 = vector.broadcast %cst_8 : f32 to vector<16x128xf32>
    %27 = arith.cmpf oeq, %7, %26 : vector<16x128xf32>
    %c2048_i32_9 = arith.constant 2048 : i32
    %28 = arith.addi %5, %c2048_i32_9 : i32
    %c2048_i32_10 = arith.constant 2048 : i32
    %29 = arith.cmpi sle, %28, %c2048_i32_10 : i32
    %30 = arith.extui %29 : i1 to i32
    %c0_i32_11 = arith.constant 0 : i32
    %31 = arith.cmpi ne, %30, %c0_i32_11 : i32
    scf.if %31 {
      %cst_13 = arith.constant 0.000000e+00 : f32
      %35 = vector.broadcast %cst_13 : f32 to vector<16x128xf32>
      %36 = arith.select %27, %19, %35 : vector<16x128xi1>, vector<16x128xf32>
      %37 = arith.extui %27 : vector<16x128xi1> to vector<16x128xi32>
      %38 = arith.sitofp %37 : vector<16x128xi32> to vector<16x128xf32>
      %c0_14 = arith.constant 0 : index
      %c0_15 = arith.constant 0 : index
      %c0_16 = arith.constant 0 : index
      %39 = vector.load %arg4[%c0_14, %c0_15, %c0_16] : memref<1x32x128xf32, #tpu.memory_space<vmem>>, vector<1x8x128xf32>
      %40 = vector.shape_cast %39 : vector<1x8x128xf32> to vector<8x128xf32>
      %41 = vector.shape_cast %25 : vector<16x128xf32> to vector<2x8x128xf32>
      %cst_17 = arith.constant dense<0.000000e+00> : vector<8x128xf32>
      %42 = vector.multi_reduction <add>, %41, %cst_17 [0] : vector<2x8x128xf32> to vector<8x128xf32>
      %43 = arith.addf %40, %42 : vector<8x128xf32>
      %c0_18 = arith.constant 0 : index
      %c0_19 = arith.constant 0 : index
      %c0_20 = arith.constant 0 : index
      %44 = vector.load %arg4[%c0_18, %c0_19, %c0_20] : memref<1x32x128xf32, #tpu.memory_space<vmem>>, vector<1x8x128xf32>
      %45 = vector.shape_cast %44 : vector<1x8x128xf32> to vector<8x128xf32>
      %46 = vector.shape_cast %43 : vector<8x128xf32> to vector<1x8x128xf32>
      tpu.vector_store %arg4[%c0_18, %c0_19, %c0_20], %46 {strides = array<i32>} : memref<1x32x128xf32, #tpu.memory_space<vmem>>, vector<1x8x128xf32>,
      %c0_21 = arith.constant 0 : index
      %c8 = arith.constant 8 : index
      %c0_22 = arith.constant 0 : index
      %47 = vector.load %arg4[%c0_21, %c8, %c0_22] : memref<1x32x128xf32, #tpu.memory_space<vmem>>, vector<1x8x128xf32>
      %48 = vector.shape_cast %47 : vector<1x8x128xf32> to vector<8x128xf32>
      %49 = vector.shape_cast %36 : vector<16x128xf32> to vector<2x8x128xf32>
      %cst_23 = arith.constant dense<0.000000e+00> : vector<8x128xf32>
      %50 = vector.multi_reduction <add>, %49, %cst_23 [0] : vector<2x8x128xf32> to vector<8x128xf32>
      %51 = arith.addf %48, %50 : vector<8x128xf32>
      %c0_24 = arith.constant 0 : index
      %c8_25 = arith.constant 8 : index
      %c0_26 = arith.constant 0 : index
      %52 = vector.load %arg4[%c0_24, %c8_25, %c0_26] : memref<1x32x128xf32, #tpu.memory_space<vmem>>, vector<1x8x128xf32>
      %53 = vector.shape_cast %52 : vector<1x8x128xf32> to vector<8x128xf32>
      %54 = vector.shape_cast %51 : vector<8x128xf32> to vector<1x8x128xf32>
      tpu.vector_store %arg4[%c0_24, %c8_25, %c0_26], %54 {strides = array<i32>} : memref<1x32x128xf32, #tpu.memory_space<vmem>>, vector<1x8x128xf32>,
      %c0_27 = arith.constant 0 : index
      %c16 = arith.constant 16 : index
      %c0_28 = arith.constant 0 : index
      %55 = vector.load %arg4[%c0_27, %c16, %c0_28] : memref<1x32x128xf32, #tpu.memory_space<vmem>>, vector<1x8x128xf32>
      %56 = vector.shape_cast %55 : vector<1x8x128xf32> to vector<8x128xf32>
      %57 = vector.shape_cast %19 : vector<16x128xf32> to vector<2x8x128xf32>
      %cst_29 = arith.constant dense<0.000000e+00> : vector<8x128xf32>
      %58 = vector.multi_reduction <add>, %57, %cst_29 [0] : vector<2x8x128xf32> to vector<8x128xf32>
      %59 = arith.addf %56, %58 : vector<8x128xf32>
      %c0_30 = arith.constant 0 : index
      %c16_31 = arith.constant 16 : index
      %c0_32 = arith.constant 0 : index
      %60 = vector.load %arg4[%c0_30, %c16_31, %c0_32] : memref<1x32x128xf32, #tpu.memory_space<vmem>>, vector<1x8x128xf32>
      %61 = vector.shape_cast %60 : vector<1x8x128xf32> to vector<8x128xf32>
      %62 = vector.shape_cast %59 : vector<8x128xf32> to vector<1x8x128xf32>
      tpu.vector_store %arg4[%c0_30, %c16_31, %c0_32], %62 {strides = array<i32>} : memref<1x32x128xf32, #tpu.memory_space<vmem>>, vector<1x8x128xf32>,
      %c0_33 = arith.constant 0 : index
      %c24 = arith.constant 24 : index
      %c0_34 = arith.constant 0 : index
      %63 = vector.load %arg4[%c0_33, %c24, %c0_34] : memref<1x32x128xf32, #tpu.memory_space<vmem>>, vector<1x8x128xf32>
      %64 = vector.shape_cast %63 : vector<1x8x128xf32> to vector<8x128xf32>
      %65 = vector.shape_cast %38 : vector<16x128xf32> to vector<2x8x128xf32>
      %cst_35 = arith.constant dense<0.000000e+00> : vector<8x128xf32>
      %66 = vector.multi_reduction <add>, %65, %cst_35 [0] : vector<2x8x128xf32> to vector<8x128xf32>
      %67 = arith.addf %64, %66 : vector<8x128xf32>
      %c0_36 = arith.constant 0 : index
      %c24_37 = arith.constant 24 : index
      %c0_38 = arith.constant 0 : index
      %68 = vector.load %arg4[%c0_36, %c24_37, %c0_38] : memref<1x32x128xf32, #tpu.memory_space<vmem>>, vector<1x8x128xf32>
      %69 = vector.shape_cast %68 : vector<1x8x128xf32> to vector<8x128xf32>
      %70 = vector.shape_cast %67 : vector<8x128xf32> to vector<1x8x128xf32>
      tpu.vector_store %arg4[%c0_36, %c24_37, %c0_38], %70 {strides = array<i32>} : memref<1x32x128xf32, #tpu.memory_space<vmem>>, vector<1x8x128xf32>,
    } else {
    }
    %true = arith.constant true
    %32 = arith.xori %29, %true : i1
    %33 = arith.extui %32 : i1 to i32
    %c0_i32_12 = arith.constant 0 : i32
    %34 = arith.cmpi ne, %33, %c0_i32_12 : i32
    scf.if %34 {
      %35 = tpu.iota {dimensions = array<i32: 0>} : vector<16x128xi32>
      %c128_i32 = arith.constant 128 : i32
      %36 = vector.broadcast %c128_i32 : i32 to vector<16x128xi32>
      %37 = arith.muli %35, %36 : vector<16x128xi32>
      %38 = tpu.iota {dimensions = array<i32: 1>} : vector<16x128xi32>
      %39 = arith.addi %37, %38 : vector<16x128xi32>
      %40 = vector.broadcast %5 : i32 to vector<16x128xi32>
      %41 = arith.addi %40, %39 : vector<16x128xi32>
      %c2048_i32_13 = arith.constant 2048 : i32
      %42 = vector.broadcast %c2048_i32_13 : i32 to vector<16x128xi32>
      %43 = arith.cmpi slt, %41, %42 : vector<16x128xi32>
      %cst_14 = arith.constant 0.000000e+00 : f32
      %44 = vector.broadcast %cst_14 : f32 to vector<16x128xf32>
      %45 = arith.select %43, %19, %44 : vector<16x128xi1>, vector<16x128xf32>
      %cst_15 = arith.constant 0.000000e+00 : f32
      %46 = vector.broadcast %cst_15 : f32 to vector<16x128xf32>
      %47 = arith.select %43, %25, %46 : vector<16x128xi1>, vector<16x128xf32>
      %48 = arith.andi %43, %27 : vector<16x128xi1>
      %cst_16 = arith.constant 1.000000e+00 : f32
      %cst_17 = arith.constant 0.000000e+00 : f32
      %49 = vector.broadcast %cst_16 : f32 to vector<16x128xf32>
      %50 = vector.broadcast %cst_17 : f32 to vector<16x128xf32>
      %51 = arith.select %48, %49, %50 : vector<16x128xi1>, vector<16x128xf32>
      %cst_18 = arith.constant 0.000000e+00 : f32
      %52 = vector.broadcast %cst_18 : f32 to vector<16x128xf32>
      %53 = arith.select %27, %45, %52 : vector<16x128xi1>, vector<16x128xf32>
      %c0_19 = arith.constant 0 : index
      %c0_20 = arith.constant 0 : index
      %c0_21 = arith.constant 0 : index
      %54 = vector.load %arg4[%c0_19, %c0_20, %c0_21] : memref<1x32x128xf32, #tpu.memory_space<vmem>>, vector<1x8x128xf32>
      %55 = vector.shape_cast %54 : vector<1x8x128xf32> to vector<8x128xf32>
      %56 = vector.shape_cast %47 : vector<16x128xf32> to vector<2x8x128xf32>
      %cst_22 = arith.constant dense<0.000000e+00> : vector<8x128xf32>
      %57 = vector.multi_reduction <add>, %56, %cst_22 [0] : vector<2x8x128xf32> to vector<8x128xf32>
      %58 = arith.addf %55, %57 : vector<8x128xf32>
      %c0_23 = arith.constant 0 : index
      %c0_24 = arith.constant 0 : index
      %c0_25 = arith.constant 0 : index
      %59 = vector.load %arg4[%c0_23, %c0_24, %c0_25] : memref<1x32x128xf32, #tpu.memory_space<vmem>>, vector<1x8x128xf32>
      %60 = vector.shape_cast %59 : vector<1x8x128xf32> to vector<8x128xf32>
      %61 = vector.shape_cast %58 : vector<8x128xf32> to vector<1x8x128xf32>
      tpu.vector_store %arg4[%c0_23, %c0_24, %c0_25], %61 {strides = array<i32>} : memref<1x32x128xf32, #tpu.memory_space<vmem>>, vector<1x8x128xf32>,
      %c0_26 = arith.constant 0 : index
      %c8 = arith.constant 8 : index
      %c0_27 = arith.constant 0 : index
      %62 = vector.load %arg4[%c0_26, %c8, %c0_27] : memref<1x32x128xf32, #tpu.memory_space<vmem>>, vector<1x8x128xf32>
      %63 = vector.shape_cast %62 : vector<1x8x128xf32> to vector<8x128xf32>
      %64 = vector.shape_cast %53 : vector<16x128xf32> to vector<2x8x128xf32>
      %cst_28 = arith.constant dense<0.000000e+00> : vector<8x128xf32>
      %65 = vector.multi_reduction <add>, %64, %cst_28 [0] : vector<2x8x128xf32> to vector<8x128xf32>
      %66 = arith.addf %63, %65 : vector<8x128xf32>
      %c0_29 = arith.constant 0 : index
      %c8_30 = arith.constant 8 : index
      %c0_31 = arith.constant 0 : index
      %67 = vector.load %arg4[%c0_29, %c8_30, %c0_31] : memref<1x32x128xf32, #tpu.memory_space<vmem>>, vector<1x8x128xf32>
      %68 = vector.shape_cast %67 : vector<1x8x128xf32> to vector<8x128xf32>
      %69 = vector.shape_cast %66 : vector<8x128xf32> to vector<1x8x128xf32>
      tpu.vector_store %arg4[%c0_29, %c8_30, %c0_31], %69 {strides = array<i32>} : memref<1x32x128xf32, #tpu.memory_space<vmem>>, vector<1x8x128xf32>,
      %c0_32 = arith.constant 0 : index
      %c16 = arith.constant 16 : index
      %c0_33 = arith.constant 0 : index
      %70 = vector.load %arg4[%c0_32, %c16, %c0_33] : memref<1x32x128xf32, #tpu.memory_space<vmem>>, vector<1x8x128xf32>
      %71 = vector.shape_cast %70 : vector<1x8x128xf32> to vector<8x128xf32>
      %72 = vector.shape_cast %45 : vector<16x128xf32> to vector<2x8x128xf32>
      %cst_34 = arith.constant dense<0.000000e+00> : vector<8x128xf32>
      %73 = vector.multi_reduction <add>, %72, %cst_34 [0] : vector<2x8x128xf32> to vector<8x128xf32>
      %74 = arith.addf %71, %73 : vector<8x128xf32>
      %c0_35 = arith.constant 0 : index
      %c16_36 = arith.constant 16 : index
      %c0_37 = arith.constant 0 : index
      %75 = vector.load %arg4[%c0_35, %c16_36, %c0_37] : memref<1x32x128xf32, #tpu.memory_space<vmem>>, vector<1x8x128xf32>
      %76 = vector.shape_cast %75 : vector<1x8x128xf32> to vector<8x128xf32>
      %77 = vector.shape_cast %74 : vector<8x128xf32> to vector<1x8x128xf32>
      tpu.vector_store %arg4[%c0_35, %c16_36, %c0_37], %77 {strides = array<i32>} : memref<1x32x128xf32, #tpu.memory_space<vmem>>, vector<1x8x128xf32>,
      %c0_38 = arith.constant 0 : index
      %c24 = arith.constant 24 : index
      %c0_39 = arith.constant 0 : index
      %78 = vector.load %arg4[%c0_38, %c24, %c0_39] : memref<1x32x128xf32, #tpu.memory_space<vmem>>, vector<1x8x128xf32>
      %79 = vector.shape_cast %78 : vector<1x8x128xf32> to vector<8x128xf32>
      %80 = vector.shape_cast %51 : vector<16x128xf32> to vector<2x8x128xf32>
      %cst_40 = arith.constant dense<0.000000e+00> : vector<8x128xf32>
      %81 = vector.multi_reduction <add>, %80, %cst_40 [0] : vector<2x8x128xf32> to vector<8x128xf32>
      %82 = arith.addf %79, %81 : vector<8x128xf32>
      %c0_41 = arith.constant 0 : index
      %c24_42 = arith.constant 24 : index
      %c0_43 = arith.constant 0 : index
      %83 = vector.load %arg4[%c0_41, %c24_42, %c0_43] : memref<1x32x128xf32, #tpu.memory_space<vmem>>, vector<1x8x128xf32>
      %84 = vector.shape_cast %83 : vector<1x8x128xf32> to vector<8x128xf32>
      %85 = vector.shape_cast %82 : vector<8x128xf32> to vector<1x8x128xf32>
      tpu.vector_store %arg4[%c0_41, %c24_42, %c0_43], %85 {strides = array<i32>} : memref<1x32x128xf32, #tpu.memory_space<vmem>>, vector<1x8x128xf32>,
    } else {
    }
    return
  }
  func.func @transform_0(%arg0: i32, %arg1: i32) -> (i32, i32) {
    %c1_i32 = arith.constant 1 : i32
    %0 = arith.muli %arg0, %c1_i32 : i32
    %1 = arith.addi %0, %arg1 : i32
    %c0_i32 = arith.constant 0 : i32
    %2 = arith.minsi %1, %c0_i32 : i32
    %c0_i32_0 = arith.constant 0 : i32
    %c0_i32_1 = arith.constant 0 : i32
    return %2, %c0_i32_0 : i32, i32
  }
  func.func @transform_1(%arg0: i32, %arg1: i32) -> (i32, i32) {
    %c1_i32 = arith.constant 1 : i32
    %0 = arith.muli %arg0, %c1_i32 : i32
    %1 = arith.addi %0, %arg1 : i32
    %c0_i32 = arith.constant 0 : i32
    %2 = arith.minsi %1, %c0_i32 : i32
    %c0_i32_0 = arith.constant 0 : i32
    %c0_i32_1 = arith.constant 0 : i32
    return %2, %c0_i32_0 : i32, i32
  }
  func.func @transform_2(%arg0: i32, %arg1: i32) -> (i32, i32, i32) {
    %c0_i32 = arith.constant 0 : i32
    %c0_i32_0 = arith.constant 0 : i32
    %c0_i32_1 = arith.constant 0 : i32
    return %arg0, %c0_i32, %c0_i32_0 : i32, i32, i32
  }
}

</mosaic_0001>

<llo_original>
// kernel: bce_jaccard_with_logits_loss.1
$region0: #{bce_jaccard_with_logits_loss.1}
  #allocation0 [shape = 'u32[]', space=smem, size = 0x4, offset = 0x4, fixed_abs, tag = 'smem constant byte address 0x4 - core index']
  #allocation1 [shape = 'u32[72,128]{1,0:T(1,128)}', space=vmem, size = 0x9000, scoped, tag = 'internal scratch']
  %s0 = inlined_call_operand.vmem [shape: f32[16,128], index: 0, kind: input, shape index: {}]
  %s1 = inlined_call_operand.vmem [shape: f32[16,128], index: 1, kind: input, shape index: {}]
  %s2 = inlined_call_operand.vmem [shape: f32[1,32,128], index: 2, kind: output, shape index: {}]
  %s3 = sld [smem:[#allocation0]]
  $region30: #{bce_jaccard_with_logits_loss.1} parent=0
    _
  %s5 = ssub.s32 1, %s3
  %s6 = scalar_select 0, %s5, %s3
  // Predicated region
  $region2: #{bce_jaccard_with_logits_loss.1} parent=0 // pred_check
    _
  $region3: #{bce_jaccard_with_logits_loss.1} parent=0 // pred_check_branch
    %8 = sbr.rel (0) target = $region5
  $region4: #{bce_jaccard_with_logits_loss.1} parent=0 // pred_region
    %s9 = sadd.s32 0, 0
    %p10 = scmp.lt.s32.totalorder %s9, 0
    %s11 = scalar_select %p10, %s9, 0
    %s12 = smul.u32 2, %s11
    %p13 = scmp.lt.s32.totalorder %s12, 1
    %s14 = scalar_select %p13, %s12, 1
    %s15 = smul.addr %s14, 8
    %s16 = scalar_lea.vmem %s0, %s15
    %s17 = sadd.s32 0, 0
    %p18 = scmp.lt.s32.totalorder %s17, 0
    %s19 = scalar_select %p18, %s17, 0
    %s20 = smul.u32 2, %s19
  $region5: #{bce_jaccard_with_logits_loss.1} parent=0 // pred_fallthru
    _
  // Predicated region
  $region6: #{bce_jaccard_with_logits_loss.1} parent=0 // pred_check
    _
  $region7: #{bce_jaccard_with_logits_loss.1} parent=0 // pred_check_branch
    %22 = sbr.rel (0) target = $region9
  $region8: #{bce_jaccard_with_logits_loss.1} parent=0 // pred_region
    %s23 = sadd.s32 0, 0
    %p24 = scmp.lt.s32.totalorder %s23, 0
    %s25 = scalar_select %p24, %s23, 0
    %s26 = smul.u32 2, %s25
    %p27 = scmp.lt.s32.totalorder %s26, 1
    %s28 = scalar_select %p27, %s26, 1
    %s29 = smul.addr %s28, 8
    %s30 = scalar_lea.vmem %s1, %s29
    %s31 = sadd.s32 0, 0
    %p32 = scmp.lt.s32.totalorder %s31, 0
    %s33 = scalar_select %p32, %s31, 0
    %s34 = smul.u32 2, %s33
  $region9: #{bce_jaccard_with_logits_loss.1} parent=0 // pred_fallthru
    _
  %s35 = sadd.s32 0, 0
  %p36 = scmp.lt.s32.totalorder %s35, 0
  %s37 = scalar_select %p36, %s35, 0
  %s38 = smul.u32 2, %s37
  %p39 = scmp.lt.s32.totalorder %s38, 1
  %s40 = scalar_select %p39, %s38, 1
  %s41 = smul.addr %s40, 8
  %s42 = scalar_lea.vmem %s0, %s41
  %s43 = sadd.s32 0, 0
  %p44 = scmp.lt.s32.totalorder %s43, 0
  %s45 = scalar_select %p44, %s43, 0
  %s46 = smul.u32 2, %s45
  %p47 = scmp.lt.s32.totalorder %s46, 1
  %s48 = scalar_select %p47, %s46, 1
  %s49 = smul.addr %s48, 8
  %s50 = scalar_lea.vmem %s1, %s49
  %s51 = sadd.s32 0, 0
  %p52 = scmp.lt.s32.totalorder %s51, 0
  %s53 = scalar_select %p52, %s51, 0
  %s54 = smul.u32 2, %s53
  %p55 = scmp.lt.s32.totalorder %s54, 1
  %s56 = scalar_select %p55, %s54, 1
  %s57 = smul.addr %s56, 8
  %s58 = scalar_lea.vmem %s0, %s57
  %s59 = sadd.s32 0, 0
  %p60 = scmp.lt.s32.totalorder %s59, 0
  %s61 = scalar_select %p60, %s59, 0
  %s62 = smul.u32 2, %s61
  %s63 = sadd.s32 0, 0
  %p64 = scmp.lt.s32.totalorder %s63, 0
  %s65 = scalar_select %p64, %s63, 0
  %s66 = smul.u32 2, %s65
  %p67 = scmp.lt.s32.totalorder %s66, 1
  %s68 = scalar_select %p67, %s66, 1
  %s69 = smul.addr %s68, 8
  %s70 = scalar_lea.vmem %s1, %s69
  %s71 = sadd.s32 0, 0
  %p72 = scmp.lt.s32.totalorder %s71, 0
  %s73 = scalar_select %p72, %s71, 0
  %s74 = smul.u32 2, %s73
  %p75 = scmp.eq.s32.totalorder 0, 0
  // Predicated region
  $region10: #{bce_jaccard_with_logits_loss.1} parent=0 // pred_check
    %p76 = pneg %p75
  $region11: #{bce_jaccard_with_logits_loss.1} parent=0 // pred_check_branch
    %78 = sbr.rel (%p76) target = $region13
  $region12: #{bce_jaccard_with_logits_loss.1} parent=0 // pred_region
    %79 = vst [vmem:[%s2] sm:$0xff] 0.0
    %80 = vst [vmem:[%s2 + $0x8] sm:$0xff] 0.0
    %81 = vst [vmem:[%s2 + $0x10] sm:$0xff] 0.0
    %82 = vst [vmem:[%s2 + $0x18] sm:$0xff] 0.0
  $region13: #{bce_jaccard_with_logits_loss.1} parent=0 // pred_fallthru
    _
  %s83 = sadd.s32 0, 0
  %s84 = smul.u32 %s83, 2048
  %v85 = vld [vmem:[%s58] sm:$0xff]
  %v86 = vld [vmem:[%s58 + $0x8] sm:$0xff]
  %v87 = vld [vmem:[%s70] sm:$0xff]
  %v88 = vld [vmem:[%s70 + $0x8] sm:$0xff]
  %v89 = vand.u32 2147483647, %v85
  %v90 = vand.u32 2147483647, %v86
  %v91 = vsub.f32 0.0, %v89
  %v92 = vsub.f32 0.0, %v90
  %v93 = vmul.f32 %v91, 1.442695
  %v94 = vpow.pop %v93
  %v95 = vmul.f32 %v92, 1.442695
  %v96 = vpow.pop %v95
  %v97 = vadd.f32 %v94, 1.0
  %v98 = vadd.f32 %v96, 1.0
  %v99 = vrcp.pop %v97
  %v100 = vmul.f32 %v97, %v99
  %v101 = vsub.f32 1.0, %v100
  %v102 = vmul.f32 %v99, %v101
  %v103 = vadd.f32 %v99, %v102
  %vm104 = vweird.f32 %v97
  %vm105 = vweird.f32 %v99
  %vm106 = vmor %vm104, %vm105
  %v107 = vsel %vm106, %v99, %v103
  %v108 = vand.u32 2147483647, %v97
  %vm109 = vcmp.eq.f32.partialorder %v108, 8.507059e+37
  %v110 = vand.u32 %v97, 2147483648
  %v111 = vor.u32 1.1754944e-38, %v110
  %v112 = vsel %vm109, %v111, %v107
  %v113 = vmul.f32 1.0, %v112
  %v114 = vrcp.pop %v98
  %v115 = vmul.f32 %v98, %v114
  %v116 = vsub.f32 1.0, %v115
  %v117 = vmul.f32 %v114, %v116
  %v118 = vadd.f32 %v114, %v117
  %vm119 = vweird.f32 %v98
  %vm120 = vweird.f32 %v114
  %vm121 = vmor %vm119, %vm120
  %v122 = vsel %vm121, %v114, %v118
  %v123 = vand.u32 2147483647, %v98
  %vm124 = vcmp.eq.f32.partialorder %v123, 8.507059e+37
  %v125 = vand.u32 %v98, 2147483648
  %v126 = vor.u32 1.1754944e-38, %v125
  %v127 = vsel %vm124, %v126, %v122
  %v128 = vmul.f32 1.0, %v127
  %vm129 = vcmp.ge.f32.partialorder %v85, 0.0
  %vm130 = vcmp.ge.f32.partialorder %v86, 0.0
  %v131 = vmul.f32 %v94, %v113
  %v132 = vmul.f32 %v96, %v128
  %v133 = vsel %vm129, %v113, %v131
  %v134 = vsel %vm130, %v128, %v132
  %v135 = vmax.f32 %v85, 0.0
  %v136 = vmax.f32 %v86, 0.0
  %v137 = vmul.f32 %v85, %v87
  %v138 = vmul.f32 %v86, %v88
  %v139 = vsub.f32 %v135, %v137
  %v140 = vsub.f32 %v136, %v138
  %v141 = vlog2.pop %v97
  %v142 = vmul.f32 %v141, 0.6931472
  %v143 = vlog2.pop %v98
  %v144 = vmul.f32 %v143, 0.6931472
  %v145 = vadd.f32 %v139, %v142
  %v146 = vadd.f32 %v140, %v144
  %vm147 = vcmp.eq.f32.partialorder %v87, 1.0
  %vm148 = vcmp.eq.f32.partialorder %v88, 1.0
  %s149 = sadd.s32 %s84, 2048
  %p150 = scmp.le.s32.totalorder %s149, 2048
  // Predicated region
  $region14: #{bce_jaccard_with_logits_loss.1} parent=0 // pred_check
    %p151 = pneg %p150
  $region15: #{bce_jaccard_with_logits_loss.1} parent=0 // pred_check_branch
    %153 = sbr.rel (%p151) target = $region17
  $region16: #{bce_jaccard_with_logits_loss.1} parent=0 // pred_region
    %v154 = vsel %vm147, %v133, 0.0
    %v155 = vsel %vm148, %v134, 0.0
    %v156 = vsel %vm147, 1, 0
    %v157 = vsel %vm148, 1, 0
    %v158 = vcvt.s32.f32 %v156
    %v159 = vcvt.s32.f32 %v157
    %v160 = vld [vmem:[%s2] sm:$0xff]
    %v161 = vadd.f32 %v145, %v146
    %v162 = vadd.f32 %v160, %v161
    %163 = vst [vmem:[%s2] sm:$0xff] %v162
    %v164 = vld [vmem:[%s2 + $0x8] sm:$0xff]
    %v165 = vadd.f32 %v154, %v155
    %v166 = vadd.f32 %v164, %v165
    %167 = vst [vmem:[%s2 + $0x8] sm:$0xff] %v166
    %v168 = vld [vmem:[%s2 + $0x10] sm:$0xff]
    %v169 = vadd.f32 %v133, %v134
    %v170 = vadd.f32 %v168, %v169
    %171 = vst [vmem:[%s2 + $0x10] sm:$0xff] %v170
    %v172 = vld [vmem:[%s2 + $0x18] sm:$0xff]
    %v173 = vadd.f32 %v158, %v159
    %v174 = vadd.f32 %v172, %v173
    %175 = vst [vmem:[%s2 + $0x18] sm:$0xff] %v174
  $region17: #{bce_jaccard_with_logits_loss.1} parent=0 // pred_fallthru
    _
  %p176 = scmp.gt.s32.totalorder %s149, 2048
  // Predicated region
  $region18: #{bce_jaccard_with_logits_loss.1} parent=0 // pred_check
    %p177 = pneg %p176
  $region19: #{bce_jaccard_with_logits_loss.1} parent=0 // pred_check_branch
    %179 = sbr.rel (%p177) target = $region21
  $region20: #{bce_jaccard_with_logits_loss.1} parent=0 // pred_region
    %v180 = vlaneseq
    %v181 = vshrl.u32 %v180, 7
    %v182 = vadd.s32 %v181, 8
    %v183 = vmul.u32 %v181, 128
    %v184 = vmul.u32 %v182, 128
    %v185 = vlaneseq
    %v186 = vand.u32 %v185, 127
    %v187 = vadd.s32 %v183, %v186
    %v188 = vadd.s32 %v184, %v186
    %v189 = vstv %s84
    %v190 = vadd.s32 %v189, %v187
    %v191 = vadd.s32 %v189, %v188
    %vm192 = vcmp.lt.s32.totalorder %v190, 2048
    %vm193 = vcmp.lt.s32.totalorder %v191, 2048
    %v194 = vsel %vm192, %v133, 0.0
    %v195 = vsel %vm193, %v134, 0.0
    %v196 = vsel %vm192, %v145, 0.0
    %v197 = vsel %vm193, %v146, 0.0
    %vm198 = vmand %vm192, %vm147
    %vm199 = vmand %vm193, %vm148
    %v200 = vsel %vm198, 1.0, 0.0
    %v201 = vsel %vm199, 1.0, 0.0
    %v202 = vsel %vm147, %v194, 0.0
    %v203 = vsel %vm148, %v195, 0.0
    %v204 = vld [vmem:[%s2] sm:$0xff]
    %v205 = vadd.f32 %v196, %v197
    %v206 = vadd.f32 %v204, %v205
    %207 = vst [vmem:[%s2] sm:$0xff] %v206
    %v208 = vld [vmem:[%s2 + $0x8] sm:$0xff]
    %v209 = vadd.f32 %v202, %v203
    %v210 = vadd.f32 %v208, %v209
    %211 = vst [vmem:[%s2 + $0x8] sm:$0xff] %v210
    %v212 = vld [vmem:[%s2 + $0x10] sm:$0xff]
    %v213 = vadd.f32 %v194, %v195
    %v214 = vadd.f32 %v212, %v213
    %215 = vst [vmem:[%s2 + $0x10] sm:$0xff] %v214
    %v216 = vld [vmem:[%s2 + $0x18] sm:$0xff]
    %v217 = vadd.f32 %v200, %v201
    %v218 = vadd.f32 %v216, %v217
    %219 = vst [vmem:[%s2 + $0x18] sm:$0xff] %v218
  $region21: #{bce_jaccard_with_logits_loss.1} parent=0 // pred_fallthru
    _
  // Predicated region
  $region22: #{bce_jaccard_with_logits_loss.1} parent=0 // pred_check
    _
  $region23: #{bce_jaccard_with_logits_loss.1} parent=0 // pred_check_branch
    %221 = sbr.rel (0) target = $region25
  $region24: #{bce_jaccard_with_logits_loss.1} parent=0 // pred_region
    _
  $region25: #{bce_jaccard_with_logits_loss.1} parent=0 // pred_fallthru
    _
  // Predicated region
  $region26: #{bce_jaccard_with_logits_loss.1} parent=0 // pred_check
    _
  $region27: #{bce_jaccard_with_logits_loss.1} parent=0 // pred_check_branch
    %223 = sbr.rel (0) target = $region29
  $region28: #{bce_jaccard_with_logits_loss.1} parent=0 // pred_region
    _
  $region29: #{bce_jaccard_with_logits_loss.1} parent=0 // pred_fallthru
    _

</llo_original>
